<compile_context>
chip_gen: v6e
topology: v6e:2x2x1
jax: 0.10.0
libtpu: 0.0.40
codegen_flags: <defaults>
</compile_context>

<pallas_src>
from functools import partial

import jax
import jax.numpy as jnp
from jax import lax
from jax.experimental import pallas as pl
from jax.experimental.pallas import tpu as pltpu


@partial(jax.jit, static_argnames=("l_tile",))
def double_conv(x, w1, b1, g1, be1, rm1, rv1, w2, b2, g2, be2, rm2, rv2, *, l_tile=128):
    """x: (B, C_in, L). w1: (C_out, C_in, 3), w2: (C_out, C_out, 3).
    g/be/rm/rv: BatchNorm1d gamma/beta/running_mean/running_var, shape (C_out,).
    Returns (B, C_out, L)."""
    eps = 1e-5
    B, C_in, L = x.shape
    C_out = w1.shape[0]
    T = l_tile
    n_t = -(-L // T)          # ceil
    Lp = n_t * T

    # ---- fold BatchNorm (+ conv bias) into per-channel scale/shift -------------
    scale1 = g1 / jnp.sqrt(rv1 + eps)
    shift1 = scale1 * (b1 - rm1) + be1
    scale2 = g2 / jnp.sqrt(rv2 + eps)
    shift2 = scale2 * (b2 - rm2) + be2
    bn_pack = jnp.stack([scale1, shift1, scale2, shift2], axis=-1).astype(jnp.float32)  # (C_out, 4)

    # ---- weight re-layout: tap-major so w_ref[k] is a clean (C_out, C_in) slice --
    # (tiny; in a real model these would be stored pre-transposed at init)
    w1_r = jnp.transpose(w1, (2, 0, 1))   # (3, C_out, C_in)
    w2_r = jnp.transpose(w2, (2, 0, 1))   # (3, C_out, C_out)

    # ---- build main tiles + tiny per-tile halo array ----------------------------
    # xp[b, c, i] = x[b, c, i-2] for i in [2, L+2), zero elsewhere; total len Lp+4.
    xp = jnp.pad(x, ((0, 0), (0, 0), (2, (Lp - L) + 2)))
    x_main = xp[:, :, 2:2 + Lp]                                        # (B, C_in, Lp)
    left = xp[:, :, :Lp].reshape(B, C_in, n_t, T)[:, :, :, :2]         # (B, C_in, n_t, 2)
    right = xp[:, :, 4:4 + Lp].reshape(B, C_in, n_t, T)[:, :, :, T - 2:]
    halo = jnp.transpose(jnp.concatenate([left, right], axis=-1), (0, 2, 1, 3))  # (B, n_t, C_in, 4)

    def kernel(x_ref, halo_ref, w1_ref, w2_ref, bn_ref, o_ref, xext_ref, h_ref):
        t = pl.program_id(1)

        # assemble [left(2) | tile(T) | right(2)] into VMEM scratch (native dtype)
        x_tile = x_ref[...][0]          # (C_in, T)
        hal = halo_ref[...][0, 0]       # (C_in, 4)
        xext_ref[:, 2:T + 2] = x_tile
        xext_ref[:, 0:2] = hal[:, 0:2]
        xext_ref[:, T + 2:T + 4] = hal[:, 2:4]

        # conv1 (3 shifted MXU matmuls, f32 acc) + BN1 + ReLU over T+2 positions
        acc = jnp.zeros((C_out, T + 2), jnp.float32)
        for k in range(3):
            acc = acc + jnp.dot(w1_ref[k], xext_ref[:, k:k + T + 2],
                                preferred_element_type=jnp.float32)
        acc = jnp.maximum(acc * bn_ref[:, 0:1] + bn_ref[:, 1:2], 0.0)

        # conv2's padding=1 zero-pads the *intermediate*: mask halo positions
        # outside the valid range [0, L) to zero.
        j = lax.broadcasted_iota(jnp.int32, (1, T + 2), 1)
        pos = t * T + j - 1
        acc = jnp.where((pos >= 0) & (pos < L), acc, 0.0)
        h_ref[...] = acc

        # conv2 + BN2 + ReLU over the T output positions of this tile
        y = jnp.zeros((C_out, T), jnp.float32)
        for k in range(3):
            y = y + jnp.dot(w2_ref[k], h_ref[:, k:k + T],
                            preferred_element_type=jnp.float32)
        y = jnp.maximum(y * bn_ref[:, 2:3] + bn_ref[:, 3:4], 0.0)
        o_ref[...] = y[None, :, :].astype(o_ref.dtype)

    out_p = pl.pallas_call(
        kernel,
        out_shape=jax.ShapeDtypeStruct((B, C_out, Lp), x.dtype),
        grid=(B, n_t),
        in_specs=[
            pl.BlockSpec((1, C_in, T), lambda b, t: (b, 0, t)),        # x tiles (pipelined)
            pl.BlockSpec((1, 1, C_in, 4), lambda b, t: (b, t, 0, 0)),  # per-tile halo columns
            pl.BlockSpec((3, C_out, C_in), lambda b, t: (0, 0, 0)),    # W1, resident
            pl.BlockSpec((3, C_out, C_out), lambda b, t: (0, 0, 0)),   # W2, resident
            pl.BlockSpec((C_out, 4), lambda b, t: (0, 0)),             # folded BN, resident
        ],
        out_specs=pl.BlockSpec((1, C_out, T), lambda b, t: (b, 0, t)),
        scratch_shapes=[
            pltpu.VMEM((C_in, T + 4), x.dtype),        # stitched input tile (+halo)
            pltpu.VMEM((C_out, T + 2), jnp.float32),   # first conv output (+halo)
        ],
        compiler_params=pltpu.CompilerParams(
            dimension_semantics=("parallel", "arbitrary"),
            vmem_limit_bytes=32 * 1024 * 1024,
        ),
    )(x_main, halo, w1_r, w2_r, bn_pack)

    return out_p[:, :, :L]


def double_conv_ref(x, w1, b1, g1, be1, rm1, rv1, w2, b2, g2, be2, rm2, rv2, eps=1e-5):
    """Pure-JAX reference matching the PyTorch forward (eval-mode BN)."""
    def conv_bn_relu(x, w, b, g, be, rm, rv):
        B, C, L = x.shape
        xp = jnp.pad(x, ((0, 0), (0, 0), (1, 1)))
        y = b[None, :, None] + sum(
            jnp.einsum("oc,bcl->bol", w[:, :, k], xp[:, :, k:k + L]) for k in range(3)
        )
        y = (y - rm[None, :, None]) * (g[None, :, None] / jnp.sqrt(rv[None, :, None] + eps)) \
            + be[None, :, None]
        return jnp.maximum(y, 0.0)

    h = conv_bn_relu(x, w1, b1, g1, be1, rm1, rv1)
    return conv_bn_relu(h, w2, b2, g2, be2, rm2, rv2)


if __name__ == "__main__":
    # Small shapes consistent with the module: L is NOT a multiple of the 128-lane
    # tile so the padding/masking and tile-boundary halo paths are exercised.
    B, C_in, C_out, L = 2, 8, 16, 200

    key = jax.random.PRNGKey(0)
    ks = jax.random.split(key, 14)

    x = jax.random.normal(ks[0], (B, C_in, L), dtype=jnp.float32)

    w1 = jax.random.normal(ks[1], (C_out, C_in, 3), jnp.float32) * (1.0 / (3 * C_in) ** 0.5)
    b1 = 0.1 * jax.random.normal(ks[2], (C_out,), jnp.float32)
    g1 = 1.0 + 0.1 * jax.random.normal(ks[3], (C_out,), jnp.float32)
    be1 = 0.1 * jax.random.normal(ks[4], (C_out,), jnp.float32)
    rm1 = 0.1 * jax.random.normal(ks[5], (C_out,), jnp.float32)
    rv1 = jax.random.uniform(ks[6], (C_out,), jnp.float32, 0.5, 1.5)

    w2 = jax.random.normal(ks[7], (C_out, C_out, 3), jnp.float32) * (1.0 / (3 * C_out) ** 0.5)
    b2 = 0.1 * jax.random.normal(ks[8], (C_out,), jnp.float32)
    g2 = 1.0 + 0.1 * jax.random.normal(ks[9], (C_out,), jnp.float32)
    be2 = 0.1 * jax.random.normal(ks[10], (C_out,), jnp.float32)
    rm2 = 0.1 * jax.random.normal(ks[11], (C_out,), jnp.float32)
    rv2 = jax.random.uniform(ks[12], (C_out,), jnp.float32, 0.5, 1.5)

    out = double_conv(x, w1, b1, g1, be1, rm1, rv1, w2, b2, g2, be2, rm2, rv2)
    out = jax.block_until_ready(out)

    ref = double_conv_ref(x, w1, b1, g1, be1, rm1, rv1, w2, b2, g2, be2, rm2, rv2)

    assert out.shape == (B, C_out, L), out.shape
    err = float(jnp.max(jnp.abs(out - ref)))
    assert err < 1e-4, f"max abs err {err}"

    print("KERNEL_OK")
</pallas_src>

<mosaic_0001>
module attributes {stable_mosaic.version = 11 : i64} {
  func.func @kernel(%arg0: i32, %arg1: i32, %arg2: memref<1x8x128xf32, #tpu.memory_space<vmem>>, %arg3: memref<1x1x8x4xf32, #tpu.memory_space<vmem>>, %arg4: memref<3x16x8xf32, #tpu.memory_space<vmem>>, %arg5: memref<3x16x16xf32, #tpu.memory_space<vmem>>, %arg6: memref<16x4xf32, #tpu.memory_space<vmem>>, %arg7: memref<1x16x128xf32, #tpu.memory_space<vmem>>, %arg8: memref<8x132xf32, #tpu.memory_space<vmem>>, %arg9: memref<16x130xf32, #tpu.memory_space<vmem>>) attributes {dimension_semantics = [#tpu.dimension_semantics<parallel>, #tpu.dimension_semantics<arbitrary>], iteration_bounds = array<i64: 2, 2>, scalar_prefetch = 0 : i64, scratch_operands = 2 : i64, tpu.core_type = #tpu.core_type<tc>, window_params = [{transform_indices = @transform_0, window_bounds = array<i64: 1, 8, 128>}, {transform_indices = @transform_1, window_bounds = array<i64: 1, 1, 8, 4>}, {pipeline_mode = #tpu.pipeline_mode<synchronous>, transform_indices = @transform_2, window_bounds = array<i64: 3, 16, 8>}, {pipeline_mode = #tpu.pipeline_mode<synchronous>, transform_indices = @transform_3, window_bounds = array<i64: 3, 16, 16>}, {pipeline_mode = #tpu.pipeline_mode<synchronous>, transform_indices = @transform_4, window_bounds = array<i64: 16, 4>}, {transform_indices = @transform_5, window_bounds = array<i64: 1, 16, 128>}]} {
    %c0 = arith.constant 0 : index
    %c0_0 = arith.constant 0 : index
    %c0_1 = arith.constant 0 : index
    %0 = vector.load %arg2[%c0, %c0_0, %c0_1] : memref<1x8x128xf32, #tpu.memory_space<vmem>>, vector<1x8x128xf32>
    %1 = vector.shape_cast %0 : vector<1x8x128xf32> to vector<8x128xf32>
    %c0_2 = arith.constant 0 : index
    %c0_3 = arith.constant 0 : index
    %c0_4 = arith.constant 0 : index
    %c0_5 = arith.constant 0 : index
    %2 = vector.load %arg3[%c0_2, %c0_3, %c0_4, %c0_5] : memref<1x1x8x4xf32, #tpu.memory_space<vmem>>, vector<1x1x8x4xf32>
    %3 = vector.shape_cast %2 : vector<1x1x8x4xf32> to vector<8x4xf32>
    %c0_6 = arith.constant 0 : index
    %c2 = arith.constant 2 : index
    %4 = vector.load %arg8[%c0_6, %c2] : memref<8x132xf32, #tpu.memory_space<vmem>>, vector<8x128xf32>
    tpu.vector_store %arg8[%c0_6, %c2], %1 {strides = array<i32>} : memref<8x132xf32, #tpu.memory_space<vmem>>, vector<8x128xf32>,
    %5 = vector.extract_strided_slice %3 {offsets = [0, 0], sizes = [8, 2], strides = [1, 1]} : vector<8x4xf32> to vector<8x2xf32>
    %c0_7 = arith.constant 0 : index
    %c0_8 = arith.constant 0 : index
    %6 = vector.load %arg8[%c0_7, %c0_8] : memref<8x132xf32, #tpu.memory_space<vmem>>, vector<8x2xf32>
    tpu.vector_store %arg8[%c0_7, %c0_8], %5 {strides = array<i32>} : memref<8x132xf32, #tpu.memory_space<vmem>>, vector<8x2xf32>,
    %7 = vector.extract_strided_slice %3 {offsets = [0, 2], sizes = [8, 2], strides = [1, 1]} : vector<8x4xf32> to vector<8x2xf32>
    %c0_9 = arith.constant 0 : index
    %c130 = arith.constant 130 : index
    %8 = vector.load %arg8[%c0_9, %c130] : memref<8x132xf32, #tpu.memory_space<vmem>>, vector<8x2xf32>
    tpu.vector_store %arg8[%c0_9, %c130], %7 {strides = array<i32>} : memref<8x132xf32, #tpu.memory_space<vmem>>, vector<8x2xf32>,
    %cst = arith.constant 0.000000e+00 : f32
    %9 = vector.broadcast %cst : f32 to vector<16x130xf32>
    %c0_10 = arith.constant 0 : index
    %c0_11 = arith.constant 0 : index
    %c0_12 = arith.constant 0 : index
    %10 = vector.load %arg4[%c0_10, %c0_11, %c0_12] : memref<3x16x8xf32, #tpu.memory_space<vmem>>, vector<1x16x8xf32>
    %11 = vector.shape_cast %10 : vector<1x16x8xf32> to vector<16x8xf32>
    %c0_13 = arith.constant 0 : index
    %c0_14 = arith.constant 0 : index
    %12 = vector.load %arg8[%c0_13, %c0_14] : memref<8x132xf32, #tpu.memory_space<vmem>>, vector<8x130xf32>
    %cst_15 = arith.constant dense<0.000000e+00> : vector<16x130xf32>
    %13 = tpu.matmul %11, %12, %cst_15 {dimension_numbers = #tpu.dot_dimension_numbers<[1], [0], [0], [1], [0, 0, 1, 1], [], []>} : vector<16x8xf32>, vector<8x130xf32>, vector<16x130xf32> -> vector<16x130xf32>
    %14 = arith.addf %9, %13 : vector<16x130xf32>
    %c1 = arith.constant 1 : index
    %c0_16 = arith.constant 0 : index
    %c0_17 = arith.constant 0 : index
    %15 = vector.load %arg4[%c1, %c0_16, %c0_17] : memref<3x16x8xf32, #tpu.memory_space<vmem>>, vector<1x16x8xf32>
    %16 = vector.shape_cast %15 : vector<1x16x8xf32> to vector<16x8xf32>
    %c0_18 = arith.constant 0 : index
    %c1_19 = arith.constant 1 : index
    %17 = vector.load %arg8[%c0_18, %c1_19] : memref<8x132xf32, #tpu.memory_space<vmem>>, vector<8x130xf32>
    %cst_20 = arith.constant dense<0.000000e+00> : vector<16x130xf32>
    %18 = tpu.matmul %16, %17, %cst_20 {dimension_numbers = #tpu.dot_dimension_numbers<[1], [0], [0], [1], [0, 0, 1, 1], [], []>} : vector<16x8xf32>, vector<8x130xf32>, vector<16x130xf32> -> vector<16x130xf32>
    %19 = arith.addf %14, %18 : vector<16x130xf32>
    %c2_21 = arith.constant 2 : index
    %c0_22 = arith.constant 0 : index
    %c0_23 = arith.constant 0 : index
    %20 = vector.load %arg4[%c2_21, %c0_22, %c0_23] : memref<3x16x8xf32, #tpu.memory_space<vmem>>, vector<1x16x8xf32>
    %21 = vector.shape_cast %20 : vector<1x16x8xf32> to vector<16x8xf32>
    %c0_24 = arith.constant 0 : index
    %c2_25 = arith.constant 2 : index
    %22 = vector.load %arg8[%c0_24, %c2_25] : memref<8x132xf32, #tpu.memory_space<vmem>>, vector<8x130xf32>
    %cst_26 = arith.constant dense<0.000000e+00> : vector<16x130xf32>
    %23 = tpu.matmul %21, %22, %cst_26 {dimension_numbers = #tpu.dot_dimension_numbers<[1], [0], [0], [1], [0, 0, 1, 1], [], []>} : vector<16x8xf32>, vector<8x130xf32>, vector<16x130xf32> -> vector<16x130xf32>
    %24 = arith.addf %19, %23 : vector<16x130xf32>
    %c0_27 = arith.constant 0 : index
    %c0_28 = arith.constant 0 : index
    %25 = vector.load %arg6[%c0_27, %c0_28] : memref<16x4xf32, #tpu.memory_space<vmem>>, vector<16x1xf32>
    %26 = vector.broadcast %25 : vector<16x1xf32> to vector<16x130xf32>
    %27 = arith.mulf %24, %26 : vector<16x130xf32>
    %c0_29 = arith.constant 0 : index
    %c1_30 = arith.constant 1 : index
    %28 = vector.load %arg6[%c0_29, %c1_30] : memref<16x4xf32, #tpu.memory_space<vmem>>, vector<16x1xf32>
    %29 = vector.broadcast %28 : vector<16x1xf32> to vector<16x130xf32>
    %30 = arith.addf %27, %29 : vector<16x130xf32>
    %cst_31 = arith.constant 0.000000e+00 : f32
    %31 = vector.broadcast %cst_31 : f32 to vector<16x130xf32>
    %32 = arith.maximumf %30, %31 : vector<16x130xf32>
    %33 = tpu.iota {dimensions = array<i32: 1>} : vector<1x130xi32>
    %c128_i32 = arith.constant 128 : i32
    %34 = arith.muli %arg1, %c128_i32 : i32
    %35 = vector.broadcast %34 : i32 to vector<1x130xi32>
    %36 = arith.addi %35, %33 : vector<1x130xi32>
    %c1_i32 = arith.constant 1 : i32
    %37 = vector.broadcast %c1_i32 : i32 to vector<1x130xi32>
    %38 = arith.subi %36, %37 : vector<1x130xi32>
    %c0_i32 = arith.constant 0 : i32
    %39 = vector.broadcast %c0_i32 : i32 to vector<1x130xi32>
    %40 = arith.cmpi sge, %38, %39 : vector<1x130xi32>
    %c200_i32 = arith.constant 200 : i32
    %41 = vector.broadcast %c200_i32 : i32 to vector<1x130xi32>
    %42 = arith.cmpi slt, %38, %41 : vector<1x130xi32>
    %43 = arith.andi %40, %42 : vector<1x130xi1>
    %cst_32 = arith.constant 0.000000e+00 : f32
    %44 = vector.shape_cast %43 : vector<1x130xi1> to vector<1x130xi1>
    %45 = vector.broadcast %44 : vector<1x130xi1> to vector<16x130xi1>
    %46 = vector.broadcast %cst_32 : f32 to vector<16x130xf32>
    %47 = arith.select %45, %32, %46 : vector<16x130xi1>, vector<16x130xf32>
    %c0_33 = arith.constant 0 : index
    %c0_34 = arith.constant 0 : index
    %48 = vector.load %arg9[%c0_33, %c0_34] : memref<16x130xf32, #tpu.memory_space<vmem>>, vector<16x130xf32>
    tpu.vector_store %arg9[%c0_33, %c0_34], %47 {strides = array<i32>} : memref<16x130xf32, #tpu.memory_space<vmem>>, vector<16x130xf32>,
    %cst_35 = arith.constant 0.000000e+00 : f32
    %49 = vector.broadcast %cst_35 : f32 to vector<16x128xf32>
    %c0_36 = arith.constant 0 : index
    %c0_37 = arith.constant 0 : index
    %c0_38 = arith.constant 0 : index
    %50 = vector.load %arg5[%c0_36, %c0_37, %c0_38] : memref<3x16x16xf32, #tpu.memory_space<vmem>>, vector<1x16x16xf32>
    %51 = vector.shape_cast %50 : vector<1x16x16xf32> to vector<16x16xf32>
    %c0_39 = arith.constant 0 : index
    %c0_40 = arith.constant 0 : index
    %52 = vector.load %arg9[%c0_39, %c0_40] : memref<16x130xf32, #tpu.memory_space<vmem>>, vector<16x128xf32>
    %cst_41 = arith.constant dense<0.000000e+00> : vector<16x128xf32>
    %53 = tpu.matmul %51, %52, %cst_41 {dimension_numbers = #tpu.dot_dimension_numbers<[1], [0], [0], [1], [0, 0, 1, 1], [], []>} : vector<16x16xf32>, vector<16x128xf32>, vector<16x128xf32> -> vector<16x128xf32>
    %54 = arith.addf %49, %53 : vector<16x128xf32>
    %c1_42 = arith.constant 1 : index
    %c0_43 = arith.constant 0 : index
    %c0_44 = arith.constant 0 : index
    %55 = vector.load %arg5[%c1_42, %c0_43, %c0_44] : memref<3x16x16xf32, #tpu.memory_space<vmem>>, vector<1x16x16xf32>
    %56 = vector.shape_cast %55 : vector<1x16x16xf32> to vector<16x16xf32>
    %c0_45 = arith.constant 0 : index
    %c1_46 = arith.constant 1 : index
    %57 = vector.load %arg9[%c0_45, %c1_46] : memref<16x130xf32, #tpu.memory_space<vmem>>, vector<16x128xf32>
    %cst_47 = arith.constant dense<0.000000e+00> : vector<16x128xf32>
    %58 = tpu.matmul %56, %57, %cst_47 {dimension_numbers = #tpu.dot_dimension_numbers<[1], [0], [0], [1], [0, 0, 1, 1], [], []>} : vector<16x16xf32>, vector<16x128xf32>, vector<16x128xf32> -> vector<16x128xf32>
    %59 = arith.addf %54, %58 : vector<16x128xf32>
    %c2_48 = arith.constant 2 : index
    %c0_49 = arith.constant 0 : index
    %c0_50 = arith.constant 0 : index
    %60 = vector.load %arg5[%c2_48, %c0_49, %c0_50] : memref<3x16x16xf32, #tpu.memory_space<vmem>>, vector<1x16x16xf32>
    %61 = vector.shape_cast %60 : vector<1x16x16xf32> to vector<16x16xf32>
    %c0_51 = arith.constant 0 : index
    %c2_52 = arith.constant 2 : index
    %62 = vector.load %arg9[%c0_51, %c2_52] : memref<16x130xf32, #tpu.memory_space<vmem>>, vector<16x128xf32>
    %cst_53 = arith.constant dense<0.000000e+00> : vector<16x128xf32>
    %63 = tpu.matmul %61, %62, %cst_53 {dimension_numbers = #tpu.dot_dimension_numbers<[1], [0], [0], [1], [0, 0, 1, 1], [], []>} : vector<16x16xf32>, vector<16x128xf32>, vector<16x128xf32> -> vector<16x128xf32>
    %64 = arith.addf %59, %63 : vector<16x128xf32>
    %c0_54 = arith.constant 0 : index
    %c2_55 = arith.constant 2 : index
    %65 = vector.load %arg6[%c0_54, %c2_55] : memref<16x4xf32, #tpu.memory_space<vmem>>, vector<16x1xf32>
    %66 = vector.broadcast %65 : vector<16x1xf32> to vector<16x128xf32>
    %67 = arith.mulf %64, %66 : vector<16x128xf32>
    %c0_56 = arith.constant 0 : index
    %c3 = arith.constant 3 : index
    %68 = vector.load %arg6[%c0_56, %c3] : memref<16x4xf32, #tpu.memory_space<vmem>>, vector<16x1xf32>
    %69 = vector.broadcast %68 : vector<16x1xf32> to vector<16x128xf32>
    %70 = arith.addf %67, %69 : vector<16x128xf32>
    %cst_57 = arith.constant 0.000000e+00 : f32
    %71 = vector.broadcast %cst_57 : f32 to vector<16x128xf32>
    %72 = arith.maximumf %70, %71 : vector<16x128xf32>
    %73 = vector.shape_cast %72 : vector<16x128xf32> to vector<1x16x128xf32>
    %c0_58 = arith.constant 0 : index
    %c0_59 = arith.constant 0 : index
    %c0_60 = arith.constant 0 : index
    %74 = vector.load %arg7[%c0_58, %c0_59, %c0_60] : memref<1x16x128xf32, #tpu.memory_space<vmem>>, vector<1x16x128xf32>
    tpu.vector_store %arg7[%c0_58, %c0_59, %c0_60], %73 {strides = array<i32>} : memref<1x16x128xf32, #tpu.memory_space<vmem>>, vector<1x16x128xf32>,
    return
  }
  func.func @transform_0(%arg0: i32, %arg1: i32) -> (i32, i32, i32) {
    %c0_i32 = arith.constant 0 : i32
    %c0_i32_0 = arith.constant 0 : i32
    return %arg0, %c0_i32, %arg1 : i32, i32, i32
  }
  func.func @transform_1(%arg0: i32, %arg1: i32) -> (i32, i32, i32, i32) {
    %c0_i32 = arith.constant 0 : i32
    %c0_i32_0 = arith.constant 0 : i32
    %c0_i32_1 = arith.constant 0 : i32
    return %arg0, %arg1, %c0_i32, %c0_i32_0 : i32, i32, i32, i32
  }
  func.func @transform_2(%arg0: i32, %arg1: i32) -> (i32, i32, i32) {
    %c0_i32 = arith.constant 0 : i32
    %c0_i32_0 = arith.constant 0 : i32
    %c0_i32_1 = arith.constant 0 : i32
    %c0_i32_2 = arith.constant 0 : i32
    return %c0_i32, %c0_i32_0, %c0_i32_1 : i32, i32, i32
  }
  func.func @transform_3(%arg0: i32, %arg1: i32) -> (i32, i32, i32) {
    %c0_i32 = arith.constant 0 : i32
    %c0_i32_0 = arith.constant 0 : i32
    %c0_i32_1 = arith.constant 0 : i32
    %c0_i32_2 = arith.constant 0 : i32
    return %c0_i32, %c0_i32_0, %c0_i32_1 : i32, i32, i32
  }
  func.func @transform_4(%arg0: i32, %arg1: i32) -> (i32, i32) {
    %c0_i32 = arith.constant 0 : i32
    %c0_i32_0 = arith.constant 0 : i32
    %c0_i32_1 = arith.constant 0 : i32
    return %c0_i32, %c0_i32_0 : i32, i32
  }
  func.func @transform_5(%arg0: i32, %arg1: i32) -> (i32, i32, i32) {
    %c0_i32 = arith.constant 0 : i32
    %c0_i32_0 = arith.constant 0 : i32
    return %arg0, %c0_i32, %arg1 : i32, i32, i32
  }
}

</mosaic_0001>

<llo_original>
// kernel: double_conv.1
$region0: #{double_conv.1}
  #allocation0 [shape = 'u32[]', space=smem, size = 0x4, offset = 0x4, fixed_abs, tag = 'smem constant byte address 0x4 - core index']
  #allocation1 [shape = 'u32[144,128]{1,0:T(1,128)}', space=vmem, size = 0x12000, scoped, tag = 'internal scratch']
  #allocation2 [shape = 'f32[8,132]{1,0:T(8,128)}', space=vmem, size = 0x2000, scoped, tag = 'scratch operand']
  #allocation3 [shape = 'f32[16,130]{1,0:T(8,128)}', space=vmem, size = 0x4000, scoped, tag = 'scratch operand']
  %s0 = inlined_call_operand.vmem [shape: f32[2,8,256], index: 0, kind: input, shape index: {}]
  %s1 = inlined_call_operand.vmem [shape: f32[2,2,8,4], index: 1, kind: input, shape index: {}]
  %s2 = inlined_call_operand.vmem [shape: f32[3,16,8], index: 2, kind: input, shape index: {}]
  %s3 = inlined_call_operand.vmem [shape: f32[3,16,16], index: 3, kind: input, shape index: {}]
  %s4 = inlined_call_operand.vmem [shape: f32[16,4], index: 4, kind: input, shape index: {}]
  %s5 = inlined_call_operand.hbm [shape: f32[2,16,256], index: 5, kind: output, shape index: {}]
  %s6 = sld [smem:[#allocation0]]
  $region53: #{double_conv.1} parent=0
    _
  %s8 = ssub.s32 1, %s6
  %s9 = scalar_select 0, %s8, %s6
  $region1: #{double_conv.1} parent=0
    #allocation4 [shape = 'u8[16384]{0}', space=vmem, size = 0x4000, scoped, tag = 'output window, operand 0']
    #allocation5 [shape = 's32[2]{0}', space=sflag, size = 0x8, scoped, tag = 'scoped memory for double_conv.1']
    %10 = vsyncpa [#allocation5], 0
    %s11 = scalar_lea.sflag [#allocation5], 1
    %12 = vsyncpa %s11, 0
    loop: start=0, step=1, limit=6
    $region2: #{double_conv.1} parent=1 // loop_pre_header
      _
    $region3: #{double_conv.1} parent=1 // loop_header
      %s14 = sphi 0, %s18
      %p15 = scmp.ge.s32.totalorder %s14, 6
      %s21 = sphi 0, %s33
      %s22 = sphi 0, %s29
      %s23 = sphi 0, %s21
      %s24 = sphi 0, %s22
      %s25 = sphi 0, %s23
      %s26 = sphi 0, %s24
      %s38 = sphi 0, %s40
      %s41 = sphi 0, %s38
      %s42 = sphi 0, %s41
      %s58 = sphi 0, %s42
      %s66 = sphi 0, %s68
      %s69 = sphi 0, %s66
      %s70 = sphi 0, %s69
      %s86 = sphi 0, %s70
      %s90 = sphi 0, %s90
      %s92 = sphi 0, %s90
      %s93 = sphi 0, %s92
      %s107 = sphi 0, %s93
      %s111 = sphi 0, %s111
      %s113 = sphi 0, %s111
      %s114 = sphi 0, %s113
      %s128 = sphi 0, %s114
      %s132 = sphi 0, %s132
      %s134 = sphi 0, %s132
      %s135 = sphi 0, %s134
      %s149 = sphi 0, %s135
      %s157 = sphi 0, %s159
      %s160 = sphi 0, %s157
      %s161 = sphi 0, %s160
      %s177 = sphi 0, %s161
    $region4: #{double_conv.1} parent=1 // loop_header_branch
      %17 = sbr.rel (%p15) target = $region8
    $region5: #{double_conv.1} parent=1 // loop_body
      %s19 = ssub.s32 %s14, 1
      %s20 = ssub.s32 %s14, 2
      %s27 = sadd.s32 1, %s22
      %p28 = scmp.ge.s32.totalorder %s27, 2
      %s29 = scalar_select %p28, 0, %s27
      %s30 = sadd.s32 1, %s21
      %s31 = scalar_select %p28, %s30, %s21
      %p32 = scmp.ge.s32.totalorder %s31, 2
      %s33 = scalar_select %p32, 0, %s31
      %s34 = ssub.s32 %s21, %s33
      %s35 = ssub.s32 %s22, %s29
      %s36 = sor.u32 %s34, %s35
      %p37 = scmp.eq.s32.totalorder %s36, 0
      %s39 = sadd.s32 %s38, 1
      %s40 = scalar_select %p37, %s38, %s39
      %p43 = pneg %p37
      %p44 = scmp.eq.s32.totalorder %s14, 3
      %p45 = por %p43, %p44
      %p46 = scmp.ne.s32.totalorder %s38, %s41
      %p47 = scmp.eq.s32.totalorder %s14, 0
      %p48 = por %p46, %p47
      %p49 = scmp.ne.s32.totalorder %s38, %s41
      %p50 = scmp.eq.s32.totalorder %s19, 3
      %p51 = por %p49, %p50
      %p52 = scmp.ne.s32.totalorder %s41, %s42
      %p53 = scmp.eq.s32.totalorder %s19, 0
      %p54 = por %p52, %p53
      %p55 = scmp.ne.s32.totalorder %s41, %s42
      %p56 = scmp.eq.s32.totalorder %s20, 3
      %p57 = por %p55, %p56
      %p59 = scmp.ne.s32.totalorder %s42, %s58
      %p60 = scmp.eq.s32.totalorder %s20, 0
      %p61 = por %p59, %p60
      %s62 = ssub.s32 %s21, %s33
      %s63 = ssub.s32 %s22, %s29
      %s64 = sor.u32 %s62, %s63
      %p65 = scmp.eq.s32.totalorder %s64, 0
      %s67 = sadd.s32 %s66, 1
      %s68 = scalar_select %p65, %s66, %s67
      %p71 = pneg %p65
      %p72 = scmp.eq.s32.totalorder %s14, 3
      %p73 = por %p71, %p72
      %p74 = scmp.ne.s32.totalorder %s66, %s69
      %p75 = scmp.eq.s32.totalorder %s14, 0
      %p76 = por %p74, %p75
      %p77 = scmp.ne.s32.totalorder %s66, %s69
      %p78 = scmp.eq.s32.totalorder %s19, 3
      %p79 = por %p77, %p78
      %p80 = scmp.ne.s32.totalorder %s69, %s70
      %p81 = scmp.eq.s32.totalorder %s19, 0
      %p82 = por %p80, %p81
      %p83 = scmp.ne.s32.totalorder %s69, %s70
      %p84 = scmp.eq.s32.totalorder %s20, 3
      %p85 = por %p83, %p84
      %p87 = scmp.ne.s32.totalorder %s70, %s86
      %p88 = scmp.eq.s32.totalorder %s20, 0
      %p89 = por %p87, %p88
      %s91 = sadd.s32 %s90, 1
      %p94 = scmp.eq.s32.totalorder %s14, 3
      %p95 = scmp.ne.s32.totalorder %s90, %s92
      %p96 = scmp.eq.s32.totalorder %s14, 0
      %p97 = por %p95, %p96
      %p98 = scmp.ne.s32.totalorder %s90, %s92
      %p99 = scmp.eq.s32.totalorder %s19, 3
      %p100 = por %p98, %p99
      %p101 = scmp.ne.s32.totalorder %s92, %s93
      %p102 = scmp.eq.s32.totalorder %s19, 0
      %p103 = por %p101, %p102
      %p104 = scmp.ne.s32.totalorder %s92, %s93
      %p105 = scmp.eq.s32.totalorder %s20, 3
      %p106 = por %p104, %p105
      %p108 = scmp.ne.s32.totalorder %s93, %s107
      %p109 = scmp.eq.s32.totalorder %s20, 0
      %p110 = por %p108, %p109
      %s112 = sadd.s32 %s111, 1
      %p115 = scmp.eq.s32.totalorder %s14, 3
      %p116 = scmp.ne.s32.totalorder %s111, %s113
      %p117 = scmp.eq.s32.totalorder %s14, 0
      %p118 = por %p116, %p117
      %p119 = scmp.ne.s32.totalorder %s111, %s113
      %p120 = scmp.eq.s32.totalorder %s19, 3
      %p121 = por %p119, %p120
      %p122 = scmp.ne.s32.totalorder %s113, %s114
      %p123 = scmp.eq.s32.totalorder %s19, 0
      %p124 = por %p122, %p123
      %p125 = scmp.ne.s32.totalorder %s113, %s114
      %p126 = scmp.eq.s32.totalorder %s20, 3
      %p127 = por %p125, %p126
      %p129 = scmp.ne.s32.totalorder %s114, %s128
      %p130 = scmp.eq.s32.totalorder %s20, 0
      %p131 = por %p129, %p130
      %s133 = sadd.s32 %s132, 1
      %p136 = scmp.eq.s32.totalorder %s14, 3
      %p137 = scmp.ne.s32.totalorder %s132, %s134
      %p138 = scmp.eq.s32.totalorder %s14, 0
      %p139 = por %p137, %p138
      %p140 = scmp.ne.s32.totalorder %s132, %s134
      %p141 = scmp.eq.s32.totalorder %s19, 3
      %p142 = por %p140, %p141
      %p143 = scmp.ne.s32.totalorder %s134, %s135
      %p144 = scmp.eq.s32.totalorder %s19, 0
      %p145 = por %p143, %p144
      %p146 = scmp.ne.s32.totalorder %s134, %s135
      %p147 = scmp.eq.s32.totalorder %s20, 3
      %p148 = por %p146, %p147
      %p150 = scmp.ne.s32.totalorder %s135, %s149
      %p151 = scmp.eq.s32.totalorder %s20, 0
      %p152 = por %p150, %p151
      %s153 = ssub.s32 %s21, %s33
      %s154 = ssub.s32 %s22, %s29
      %s155 = sor.u32 %s153, %s154
      %p156 = scmp.eq.s32.totalorder %s155, 0
      %s158 = sadd.s32 %s157, 1
      %s159 = scalar_select %p156, %s157, %s158
      %p162 = pneg %p156
      %p163 = scmp.eq.s32.totalorder %s14, 3
      %p164 = por %p162, %p163
      %p165 = scmp.ne.s32.totalorder %s157, %s160
      %p166 = scmp.eq.s32.totalorder %s14, 0
      %p167 = por %p165, %p166
      %p168 = scmp.ne.s32.totalorder %s157, %s160
      %p169 = scmp.eq.s32.totalorder %s19, 3
      %p170 = por %p168, %p169
      %p171 = scmp.ne.s32.totalorder %s160, %s161
      %p172 = scmp.eq.s32.totalorder %s19, 0
      %p173 = por %p171, %p172
      %p174 = scmp.ne.s32.totalorder %s160, %s161
      %p175 = scmp.eq.s32.totalorder %s20, 3
      %p176 = por %p174, %p175
      %p178 = scmp.ne.s32.totalorder %s161, %s177
      %p179 = scmp.eq.s32.totalorder %s20, 0
      %p180 = por %p178, %p179
      %p181 = scmp.le.s32.totalorder 1, %s14
      %p182 = scmp.lt.s32.totalorder %s14, 5
      %p183 = pnand %p181, %p182
      %p184 = pneg %p183
      // Predicated region
      $region9: #{double_conv.1} parent=5 // pred_check
        _
      $region10: #{double_conv.1} parent=5 // pred_check_branch
        %186 = sbr.rel (%p183) target = $region12
      $region11: #{double_conv.1} parent=5 // pred_region
        %s187 = ssub.s32 %s14, 1
        // Predicated region
        $region13: #{double_conv.1} parent=11 // pred_check
          %p188 = pneg %p103
        $region14: #{double_conv.1} parent=11 // pred_check_branch
          %190 = sbr.rel (%p188) target = $region16
        $region15: #{double_conv.1} parent=11 // pred_region
          _
        $region16: #{double_conv.1} parent=11 // pred_fallthru
          _
        // Predicated region
        $region17: #{double_conv.1} parent=11 // pred_check
          %p191 = pneg %p124
        $region18: #{double_conv.1} parent=11 // pred_check_branch
          %193 = sbr.rel (%p191) target = $region20
        $region19: #{double_conv.1} parent=11 // pred_region
          _
        $region20: #{double_conv.1} parent=11 // pred_fallthru
          _
        // Predicated region
        $region21: #{double_conv.1} parent=11 // pred_check
          %p194 = pneg %p145
        $region22: #{double_conv.1} parent=11 // pred_check_branch
          %196 = sbr.rel (%p194) target = $region24
        $region23: #{double_conv.1} parent=11 // pred_region
          _
        $region24: #{double_conv.1} parent=11 // pred_fallthru
          _
      $region12: #{double_conv.1} parent=5 // pred_fallthru
        _
      %p197 = scmp.lt.s32.totalorder %s14, 4
      // Predicated region
      $region25: #{double_conv.1} parent=5 // pred_check
        %p198 = pneg %p197
      $region26: #{double_conv.1} parent=5 // pred_check_branch
        %200 = sbr.rel (%p198) target = $region28
      $region27: #{double_conv.1} parent=5 // pred_region
        // Predicated region
        $region29: #{double_conv.1} parent=27 // pred_check
          %p201 = pneg %p48
        $region30: #{double_conv.1} parent=27 // pred_check_branch
          %203 = sbr.rel (%p201) target = $region32
        $region31: #{double_conv.1} parent=27 // pred_region
          %p204 = scmp.lt.s32.totalorder %s21, 1
          %s205 = scalar_select %p204, %s21, 1
          %p206 = scmp.lt.s32.totalorder %s22, 1
          %s207 = scalar_select %p206, %s22, 1
          %s208 = smul.addr %s205, 2
          %s209 = sadd.s32 %s207, %s208
          %s210 = smul.addr %s209, 8
          %s211 = scalar_lea.vmem %s0, %s210
        $region32: #{double_conv.1} parent=27 // pred_fallthru
          _
        // Predicated region
        $region33: #{double_conv.1} parent=27 // pred_check
          %p212 = pneg %p76
        $region34: #{double_conv.1} parent=27 // pred_check_branch
          %214 = sbr.rel (%p212) target = $region36
        $region35: #{double_conv.1} parent=27 // pred_region
          %p215 = scmp.lt.s32.totalorder %s21, 1
          %s216 = scalar_select %p215, %s21, 1
          %p217 = scmp.lt.s32.totalorder %s22, 1
          %s218 = scalar_select %p217, %s22, 1
          %s219 = smul.addr %s216, 2
          %s220 = sadd.s32 %s218, %s219
          %s221 = smul.addr %s220, 8
          %s222 = scalar_lea.vmem %s1, %s221
        $region36: #{double_conv.1} parent=27 // pred_fallthru
          _
      $region28: #{double_conv.1} parent=5 // pred_fallthru
        _
      %p223 = scmp.le.s32.totalorder 1, %s14
      %p224 = scmp.lt.s32.totalorder %s14, 5
      %p225 = pnand %p223, %p224
      %p226 = pneg %p225
      // Predicated region
      $region37: #{double_conv.1} parent=5 // pred_check
        _
      $region38: #{double_conv.1} parent=5 // pred_check_branch
        %228 = sbr.rel (%p225) target = $region40
      $region39: #{double_conv.1} parent=5 // pred_region
        %s229 = ssub.s32 %s14, 1
        %p230 = scmp.lt.s32.totalorder %s23, 1
        %s231 = scalar_select %p230, %s23, 1
        %p232 = scmp.lt.s32.totalorder %s24, 1
        %s233 = scalar_select %p232, %s24, 1
        %s234 = smul.addr %s231, 2
        %s235 = sadd.s32 %s233, %s234
        %s236 = smul.addr %s235, 8
        %s237 = scalar_lea.vmem %s0, %s236
        %p238 = pneg %p54
        %p239 = pneg %p51
        %p240 = scmp.lt.s32.totalorder %s23, 1
        %s241 = scalar_select %p240, %s23, 1
        %p242 = scmp.lt.s32.totalorder %s24, 1
        %s243 = scalar_select %p242, %s24, 1
        %s244 = smul.addr %s241, 2
        %s245 = sadd.s32 %s243, %s244
        %s246 = smul.addr %s245, 8
        %s247 = scalar_lea.vmem %s1, %s246
        %p248 = pneg %p82
        %p249 = pneg %p79
        %p250 = pneg %p103
        %p251 = pneg %p100
        %p252 = pneg %p124
        %p253 = pneg %p121
        %p254 = pneg %p145
        %p255 = pneg %p142
        %p256 = pneg %p173
        %p257 = pneg %p170
        %s258 = sand.u32 %s160, 1
        %s259 = scalar_lea.sflag [#allocation5], %s258
        %s260 = sand.u32 %s160, 1
        %s261 = smul.addr %s260, 16
        %s262 = scalar_lea.vmem [#allocation4], %s261
        %p263 = scmp.lt.s32.totalorder %s23, 1
        %s264 = scalar_select %p263, %s23, 1
        %p265 = scmp.lt.s32.totalorder %s24, 1
        %s266 = scalar_select %p265, %s24, 1
        %s267 = smul.addr %s264, 2
        %s268 = sadd.s32 %s266, %s267
        %s269 = smul.addr %s268, 8
        %s270 = scalar_lea.vmem %s0, %s269
        %p271 = scmp.lt.s32.totalorder %s23, 1
        %s272 = scalar_select %p271, %s23, 1
        %p273 = scmp.lt.s32.totalorder %s24, 1
        %s274 = scalar_select %p273, %s24, 1
        %s275 = smul.addr %s272, 2
        %s276 = sadd.s32 %s274, %s275
        %s277 = smul.addr %s276, 8
        %s278 = scalar_lea.vmem %s1, %s277
        %v279 = vld [vmem:[%s270] sm:$0xff]
        %v280 = vld [vmem:[%s278] sm:$0xff]
        %282 = vrot.lane.b32.xlu0 %v279, 2
        %v283 = vpop.permute.xlu0 %282
        %vm285 = vcmask 1047568
        %286 = vst.msk [vmem:[#allocation2] sm:$0xff] %vm285, %v283
        %vm287 = vcmask 15360
        %288 = vst.msk [vmem:[#allocation2 + $0x8] sm:$0xff] %vm287, %v283
        %289 = vst.msk [vmem:[#allocation2] sm:$0xff] %vm287, %v280
        %vm290 = vcmask 31760
        %291 = vst.msk [vmem:[#allocation2 + $0x8] sm:$0xff] %vm290, %v280
        %v292 = vld [vmem:[%s2] sm:$0xff]
        %v293 = vld [vmem:[%s2 + $0x8] sm:$0xff]
        %v294 = vld [vmem:[#allocation2] sm:$0xff]
        %v295 = vld [vmem:[#allocation2 + $0x8] sm:$0xff]
        %s296 = scalar_lea.vmem %s2, 16
        %v297 = vld [vmem:[%s296] sm:$0xff]
        %v298 = vld [vmem:[%s296 + $0x8] sm:$0xff]
        %301 = vrot.lane.b32.xlu0 %v294, 127
        %v302 = vpop.permute.xlu0 %301
        %303 = vrot.lane.b32.xlu0 %v295, 127
        %v304 = vpop.permute.xlu0 %303
        %vm305 = vcmask 1039360
        %v306 = vsel %vm305, %v302, %v304
        %vm309 = vcmask 64512
        %v311 = vsel %vm309, %v297, 0
        %v314 = vsel %vm309, %v298, 0
        %316 = vmatprep.subr.mxu0 0.0
        %317 = vmatpush1.msra.mxu0 0.0
        %318 = vmatprep.subr.mxu0 0.0
        %319 = vmatpush1.msra.mxu0 0.0
        %320 = vmatprep.subr.mxu0 0.0
        %321 = vmatpush1.msra.mxu0 0.0
        %322 = vmatprep.subr.mxu0 0.0
        %323 = vmatpush1.msra.mxu0 0.0
        %324 = vmatprep.subr.mxu0 0.0
        %325 = vmatpush1.msra.mxu0 0.0
        %326 = vmatprep.subr.mxu0 0.0
        %327 = vmatpush1.msra.mxu0 0.0
        %328 = vmatprep.subr.mxu0 0.0
        %329 = vmatpush1.msra.mxu0 0.0
        %330 = vmatprep.subr.mxu0 0.0
        %331 = vmatpush1.msra.mxu0 0.0
        %332 = vmatprep.subr.mxu0 0.0
        %333 = vmatpush1.msra.mxu0 0.0
        %334 = vmatprep.subr.mxu0 0.0
        %335 = vmatpush1.msra.mxu0 0.0
        %336 = vmatprep.subr.mxu0 0.0
        %337 = vmatpush1.msra.mxu0 0.0
        %338 = vmatprep.subr.mxu0 0.0
        %339 = vmatpush1.msra.mxu0 0.0
        %340 = vmatprep.subr.mxu0 0.0
        %341 = vmatpush1.msra.mxu0 0.0
        %342 = vmatprep.subr.mxu0 0.0
        %343 = vmatpush1.msra.mxu0 0.0
        %344 = vmatprep.subr.mxu0 0.0
        %345 = vmatpush1.msra.mxu0 0.0
        %346 = vmatprep.subr.mxu0 %v304
        %347 = vmatpush1.msra.mxu0 %v306
        %348 = vmatprep.subr.mxu0 0.0
        %349 = vmatpush2.msra.mxu0 0.0
        %350 = vmatprep.subr.mxu0 0.0
        %351 = vmatpush2.msra.mxu0 0.0
        %352 = vmatprep.subr.mxu0 0.0
        %353 = vmatpush2.msra.mxu0 0.0
        %354 = vmatprep.subr.mxu0 0.0
        %355 = vmatpush2.msra.mxu0 0.0
        %356 = vmatprep.subr.mxu0 0.0
        %357 = vmatpush2.msra.mxu0 0.0
        %358 = vmatprep.subr.mxu0 0.0
        %359 = vmatpush2.msra.mxu0 0.0
        %360 = vmatprep.subr.mxu0 0.0
        %361 = vmatpush2.msra.mxu0 0.0
        %362 = vmatprep.subr.mxu0 0.0
        %363 = vmatpush2.msra.mxu0 0.0
        %364 = vmatprep.subr.mxu0 0.0
        %365 = vmatpush2.msra.mxu0 0.0
        %366 = vmatprep.subr.mxu0 0.0
        %367 = vmatpush2.msra.mxu0 0.0
        %368 = vmatprep.subr.mxu0 0.0
        %369 = vmatpush2.msra.mxu0 0.0
        %370 = vmatprep.subr.mxu0 0.0
        %371 = vmatpush2.msra.mxu0 0.0
        %372 = vmatprep.subr.mxu0 0.0
        %373 = vmatpush2.msra.mxu0 0.0
        %374 = vmatprep.subr.mxu0 0.0
        %375 = vmatpush2.msra.mxu0 0.0
        %376 = vmatprep.subr.mxu0 0.0
        %377 = vmatpush2.msra.mxu0 0.0
        %378 = vmatprep.subr.mxu0 0.0
        %379 = vmatpush2.msra.mxu0 0.0
        %380 = vmatprep.mubr.f32.mxu0 0.0
        %381 = vmatmul.mubr.f32.gmra.mxu0 %v311
        %v382 = vpop.f32.mrf.mxu0
        %v383 = vadd.f32 0.0, %v382
        %v384 = vpop.f32.mrf.mxu0
        %v385 = vadd.f32 0.0, %v384
        %386 = vmatprep.mubr.f32.mxu0 0.0
        %387 = vmatmul.mubr.f32.gmra.mxu0 %v314
        %v388 = vpop.f32.mrf.mxu0
        %v389 = vadd.f32 0.0, %v388
        %v390 = vpop.f32.mrf.mxu0
        %v391 = vadd.f32 0.0, %v390
        %392 = vdwg.mxu0
        %v394 = vsel %vm309, %v292, 0
        %v397 = vsel %vm309, %v293, 0
        %399 = vmatprep.subr.mxu0 0.0
        %400 = vmatpush1.msra.mxu0 0.0
        %401 = vmatprep.subr.mxu0 0.0
        %402 = vmatpush1.msra.mxu0 0.0
        %403 = vmatprep.subr.mxu0 0.0
        %404 = vmatpush1.msra.mxu0 0.0
        %405 = vmatprep.subr.mxu0 0.0
        %406 = vmatpush1.msra.mxu0 0.0
        %407 = vmatprep.subr.mxu0 0.0
        %408 = vmatpush1.msra.mxu0 0.0
        %409 = vmatprep.subr.mxu0 0.0
        %410 = vmatpush1.msra.mxu0 0.0
        %411 = vmatprep.subr.mxu0 0.0
        %412 = vmatpush1.msra.mxu0 0.0
        %413 = vmatprep.subr.mxu0 0.0
        %414 = vmatpush1.msra.mxu0 0.0
        %415 = vmatprep.subr.mxu0 0.0
        %416 = vmatpush1.msra.mxu0 0.0
        %417 = vmatprep.subr.mxu0 0.0
        %418 = vmatpush1.msra.mxu0 0.0
        %419 = vmatprep.subr.mxu0 0.0
        %420 = vmatpush1.msra.mxu0 0.0
        %421 = vmatprep.subr.mxu0 0.0
        %422 = vmatpush1.msra.mxu0 0.0
        %423 = vmatprep.subr.mxu0 0.0
        %424 = vmatpush1.msra.mxu0 0.0
        %425 = vmatprep.subr.mxu0 0.0
        %426 = vmatpush1.msra.mxu0 0.0
        %427 = vmatprep.subr.mxu0 0.0
        %428 = vmatpush1.msra.mxu0 0.0
        %429 = vmatprep.subr.mxu0 %v295
        %430 = vmatpush1.msra.mxu0 %v294
        %431 = vmatprep.subr.mxu0 0.0
        %432 = vmatpush2.msra.mxu0 0.0
        %433 = vmatprep.subr.mxu0 0.0
        %434 = vmatpush2.msra.mxu0 0.0
        %435 = vmatprep.subr.mxu0 0.0
        %436 = vmatpush2.msra.mxu0 0.0
        %437 = vmatprep.subr.mxu0 0.0
        %438 = vmatpush2.msra.mxu0 0.0
        %439 = vmatprep.subr.mxu0 0.0
        %440 = vmatpush2.msra.mxu0 0.0
        %441 = vmatprep.subr.mxu0 0.0
        %442 = vmatpush2.msra.mxu0 0.0
        %443 = vmatprep.subr.mxu0 0.0
        %444 = vmatpush2.msra.mxu0 0.0
        %445 = vmatprep.subr.mxu0 0.0
        %446 = vmatpush2.msra.mxu0 0.0
        %447 = vmatprep.subr.mxu0 0.0
        %448 = vmatpush2.msra.mxu0 0.0
        %449 = vmatprep.subr.mxu0 0.0
        %450 = vmatpush2.msra.mxu0 0.0
        %451 = vmatprep.subr.mxu0 0.0
        %452 = vmatpush2.msra.mxu0 0.0
        %453 = vmatprep.subr.mxu0 0.0
        %454 = vmatpush2.msra.mxu0 0.0
        %455 = vmatprep.subr.mxu0 0.0
        %456 = vmatpush2.msra.mxu0 0.0
        %457 = vmatprep.subr.mxu0 0.0
        %458 = vmatpush2.msra.mxu0 0.0
        %459 = vmatprep.subr.mxu0 0.0
        %460 = vmatpush2.msra.mxu0 0.0
        %461 = vmatprep.subr.mxu0 0.0
        %462 = vmatpush2.msra.mxu0 0.0
        %463 = vmatprep.mubr.f32.mxu0 0.0
        %464 = vmatmul.mubr.f32.gmra.mxu0 %v394
        %v465 = vpop.f32.mrf.mxu0
        %v466 = vadd.f32 %v383, %v465
        %v467 = vpop.f32.mrf.mxu0
        %v468 = vadd.f32 %v385, %v467
        %469 = vmatprep.mubr.f32.mxu0 0.0
        %470 = vmatmul.mubr.f32.gmra.mxu0 %v397
        %v471 = vpop.f32.mrf.mxu0
        %v472 = vadd.f32 %v389, %v471
        %v473 = vpop.f32.mrf.mxu0
        %v474 = vadd.f32 %v391, %v473
        %475 = vdwg.mxu0
        %s476 = scalar_lea.vmem %s2, 32
        %v477 = vld [vmem:[%s476] sm:$0xff]
        %v478 = vld [vmem:[%s476 + $0x8] sm:$0xff]
        %479 = vrot.lane.b32.xlu0 %v294, 126
        %v480 = vpop.permute.xlu0 %479
        %481 = vrot.lane.b32.xlu0 %v295, 126
        %v482 = vpop.permute.xlu0 %481
        %vm483 = vcmask 1031168
        %v484 = vsel %vm483, %v480, %v482
        %v488 = vsel %vm309, %v477, 0
        %v491 = vsel %vm309, %v478, 0
        %493 = vmatprep.subr.mxu0 0.0
        %494 = vmatpush1.msra.mxu0 0.0
        %495 = vmatprep.subr.mxu0 0.0
        %496 = vmatpush1.msra.mxu0 0.0
        %497 = vmatprep.subr.mxu0 0.0
        %498 = vmatpush1.msra.mxu0 0.0
        %499 = vmatprep.subr.mxu0 0.0
        %500 = vmatpush1.msra.mxu0 0.0
        %501 = vmatprep.subr.mxu0 0.0
        %502 = vmatpush1.msra.mxu0 0.0
        %503 = vmatprep.subr.mxu0 0.0
        %504 = vmatpush1.msra.mxu0 0.0
        %505 = vmatprep.subr.mxu0 0.0
        %506 = vmatpush1.msra.mxu0 0.0
        %507 = vmatprep.subr.mxu0 0.0
        %508 = vmatpush1.msra.mxu0 0.0
        %509 = vmatprep.subr.mxu0 0.0
        %510 = vmatpush1.msra.mxu0 0.0
        %511 = vmatprep.subr.mxu0 0.0
        %512 = vmatpush1.msra.mxu0 0.0
        %513 = vmatprep.subr.mxu0 0.0
        %514 = vmatpush1.msra.mxu0 0.0
        %515 = vmatprep.subr.mxu0 0.0
        %516 = vmatpush1.msra.mxu0 0.0
        %517 = vmatprep.subr.mxu0 0.0
        %518 = vmatpush1.msra.mxu0 0.0
        %519 = vmatprep.subr.mxu0 0.0
        %520 = vmatpush1.msra.mxu0 0.0
        %521 = vmatprep.subr.mxu0 0.0
        %522 = vmatpush1.msra.mxu0 0.0
        %523 = vmatprep.subr.mxu0 %v482
        %524 = vmatpush1.msra.mxu0 %v484
        %525 = vmatprep.subr.mxu0 0.0
        %526 = vmatpush2.msra.mxu0 0.0
        %527 = vmatprep.subr.mxu0 0.0
        %528 = vmatpush2.msra.mxu0 0.0
        %529 = vmatprep.subr.mxu0 0.0
        %530 = vmatpush2.msra.mxu0 0.0
        %531 = vmatprep.subr.mxu0 0.0
        %532 = vmatpush2.msra.mxu0 0.0
        %533 = vmatprep.subr.mxu0 0.0
        %534 = vmatpush2.msra.mxu0 0.0
        %535 = vmatprep.subr.mxu0 0.0
        %536 = vmatpush2.msra.mxu0 0.0
        %537 = vmatprep.subr.mxu0 0.0
        %538 = vmatpush2.msra.mxu0 0.0
        %539 = vmatprep.subr.mxu0 0.0
        %540 = vmatpush2.msra.mxu0 0.0
        %541 = vmatprep.subr.mxu0 0.0
        %542 = vmatpush2.msra.mxu0 0.0
        %543 = vmatprep.subr.mxu0 0.0
        %544 = vmatpush2.msra.mxu0 0.0
        %545 = vmatprep.subr.mxu0 0.0
        %546 = vmatpush2.msra.mxu0 0.0
        %547 = vmatprep.subr.mxu0 0.0
        %548 = vmatpush2.msra.mxu0 0.0
        %549 = vmatprep.subr.mxu0 0.0
        %550 = vmatpush2.msra.mxu0 0.0
        %551 = vmatprep.subr.mxu0 0.0
        %552 = vmatpush2.msra.mxu0 0.0
        %553 = vmatprep.subr.mxu0 0.0
        %554 = vmatpush2.msra.mxu0 0.0
        %555 = vmatprep.subr.mxu0 0.0
        %556 = vmatpush2.msra.mxu0 0.0
        %557 = vmatprep.mubr.f32.mxu0 0.0
        %558 = vmatmul.mubr.f32.gmra.mxu0 %v488
        %v559 = vpop.f32.mrf.mxu0
        %v560 = vadd.f32 0.0, %v559
        %v561 = vpop.f32.mrf.mxu0
        %v562 = vadd.f32 0.0, %v561
        %563 = vmatprep.mubr.f32.mxu0 0.0
        %564 = vmatmul.mubr.f32.gmra.mxu0 %v491
        %v565 = vpop.f32.mrf.mxu0
        %v566 = vadd.f32 0.0, %v565
        %v567 = vpop.f32.mrf.mxu0
        %v568 = vadd.f32 0.0, %v567
        %569 = vdwg.mxu0
        %v570 = vadd.f32 %v466, %v560
        %v571 = vadd.f32 %v468, %v562
        %v572 = vadd.f32 %v472, %v566
        %v573 = vadd.f32 %v474, %v568
        %v574 = vld [vmem:[%s4] sm:$0xff]
        %v575 = vld [vmem:[%s4 + $0x8] sm:$0xff]
        %577 = vset.pattern.permute.xlu0 0
        %578 = vperm.xlu0 %577, %v574
        %v579 = vpop.permute.xlu0 %578
        %582 = vset.pattern.permute.xlu0 0
        %583 = vperm.xlu0 %582, %v575
        %v584 = vpop.permute.xlu0 %583
        %v586 = vmul.f32 %v570, %v579
        %v587 = vmul.f32 %v571, %v579
        %v588 = vmul.f32 %v572, %v584
        %v589 = vmul.f32 %v573, %v584
        %590 = vset.pattern.permute.xlu0 1
        %591 = vperm.xlu0 %590, %v574
        %v592 = vpop.permute.xlu0 %591
        %594 = vset.pattern.permute.xlu0 1
        %595 = vperm.xlu0 %594, %v575
        %v596 = vpop.permute.xlu0 %595
        %v598 = vadd.f32 %v586, %v592
        %v599 = vadd.f32 %v587, %v592
        %v600 = vadd.f32 %v588, %v596
        %v601 = vadd.f32 %v589, %v596
        %v602 = vmax.f32 %v598, 0.0
        %v603 = vmax.f32 %v599, 0.0
        %v604 = vmax.f32 %v600, 0.0
        %v605 = vmax.f32 %v601, 0.0
        %v606 = vlaneseq
        %v607 = vand.u32 %v606, 127
        %v608 = vadd.s32 %v607, 128
        %s609 = smul.u32 %s24, 128
        %v610 = vstv %s609
        %v611 = vadd.s32 %v610, %v607
        %v612 = vadd.s32 %v610, %v608
        %v613 = vsub.s32 %v611, 1
        %v614 = vsub.s32 %v612, 1
        %vm615 = vcmp.ge.s32.totalorder %v613, 0
        %vm616 = vcmp.ge.s32.totalorder %v614, 0
        %vm617 = vcmp.lt.s32.totalorder %v613, 200
        %vm618 = vcmp.lt.s32.totalorder %v614, 200
        %vm619 = vmand %vm615, %vm617
        %vm620 = vmand %vm616, %vm618
        %v621 = vsel %vm619, 1, 0
        %v622 = vsel %vm620, 1, 0
        %vm623 = vcmp.eq.s32.totalorder %v621, 1
        %vm624 = vcmp.eq.s32.totalorder %v622, 1
        %v625 = vsel %vm623, %v602, 0.0
        %v626 = vsel %vm624, %v603, 0.0
        %v627 = vsel %vm623, %v604, 0.0
        %v628 = vsel %vm624, %v605, 0.0
        %629 = vst [vmem:[#allocation3] sm:$0xff] %v625
        %630 = vst.msk [vmem:[#allocation3 + $0x8] sm:$0xff] %vm287, %v626
        %631 = vst [vmem:[#allocation3 + $0x10] sm:$0xff] %v627
        %632 = vst.msk [vmem:[#allocation3 + $0x18] sm:$0xff] %vm287, %v628
        %v633 = vld [vmem:[%s3] sm:$0xff]
        %v634 = vld [vmem:[%s3 + $0x8] sm:$0xff]
        %v635 = vld [vmem:[#allocation3] sm:$0xff]
        %v636 = vld [vmem:[#allocation3 + $0x10] sm:$0xff]
        %s637 = scalar_lea.vmem %s3, 16
        %v638 = vld [vmem:[%s637] sm:$0xff]
        %v639 = vld [vmem:[%s637 + $0x8] sm:$0xff]
        %v640 = vld [vmem:[#allocation3 + $0x8] sm:$0xff]
        %v641 = vld [vmem:[#allocation3 + $0x18] sm:$0xff]
        %646 = vrot.lane.b32.xlu0 %v635, 127
        %v647 = vpop.permute.xlu0 %646
        %648 = vrot.lane.b32.xlu0 %v640, 127
        %v649 = vpop.permute.xlu0 %648
        %650 = vrot.lane.b32.xlu0 %v636, 127
        %v651 = vpop.permute.xlu0 %650
        %652 = vrot.lane.b32.xlu0 %v641, 127
        %v653 = vpop.permute.xlu0 %652
        %v654 = vsel %vm305, %v647, %v649
        %v655 = vsel %vm305, %v651, %v653
        %vm658 = vcmask 130048
        %v660 = vsel %vm658, %v638, 0
        %v663 = vsel %vm658, %v639, 0
        %665 = vmatprep.subr.mxu0 0.0
        %666 = vmatpush1.msra.mxu0 0.0
        %667 = vmatprep.subr.mxu0 0.0
        %668 = vmatpush1.msra.mxu0 0.0
        %669 = vmatprep.subr.mxu0 0.0
        %670 = vmatpush1.msra.mxu0 0.0
        %671 = vmatprep.subr.mxu0 0.0
        %672 = vmatpush1.msra.mxu0 0.0
        %673 = vmatprep.subr.mxu0 0.0
        %674 = vmatpush1.msra.mxu0 0.0
        %675 = vmatprep.subr.mxu0 0.0
        %676 = vmatpush1.msra.mxu0 0.0
        %677 = vmatprep.subr.mxu0 0.0
        %678 = vmatpush1.msra.mxu0 0.0
        %679 = vmatprep.subr.mxu0 0.0
        %680 = vmatpush1.msra.mxu0 0.0
        %681 = vmatprep.subr.mxu0 0.0
        %682 = vmatpush1.msra.mxu0 0.0
        %683 = vmatprep.subr.mxu0 0.0
        %684 = vmatpush1.msra.mxu0 0.0
        %685 = vmatprep.subr.mxu0 0.0
        %686 = vmatpush1.msra.mxu0 0.0
        %687 = vmatprep.subr.mxu0 0.0
        %688 = vmatpush1.msra.mxu0 0.0
        %689 = vmatprep.subr.mxu0 0.0
        %690 = vmatpush1.msra.mxu0 0.0
        %691 = vmatprep.subr.mxu0 0.0
        %692 = vmatpush1.msra.mxu0 0.0
        %693 = vmatprep.subr.mxu0 0.0
        %694 = vmatpush1.msra.mxu0 %v655
        %695 = vmatprep.subr.mxu0 0.0
        %696 = vmatpush1.msra.mxu0 %v654
        %697 = vmatprep.subr.mxu0 0.0
        %698 = vmatpush2.msra.mxu0 0.0
        %699 = vmatprep.subr.mxu0 0.0
        %700 = vmatpush2.msra.mxu0 0.0
        %701 = vmatprep.subr.mxu0 0.0
        %702 = vmatpush2.msra.mxu0 0.0
        %703 = vmatprep.subr.mxu0 0.0
        %704 = vmatpush2.msra.mxu0 0.0
        %705 = vmatprep.subr.mxu0 0.0
        %706 = vmatpush2.msra.mxu0 0.0
        %707 = vmatprep.subr.mxu0 0.0
        %708 = vmatpush2.msra.mxu0 0.0
        %709 = vmatprep.subr.mxu0 0.0
        %710 = vmatpush2.msra.mxu0 0.0
        %711 = vmatprep.subr.mxu0 0.0
        %712 = vmatpush2.msra.mxu0 0.0
        %713 = vmatprep.subr.mxu0 0.0
        %714 = vmatpush2.msra.mxu0 0.0
        %715 = vmatprep.subr.mxu0 0.0
        %716 = vmatpush2.msra.mxu0 0.0
        %717 = vmatprep.subr.mxu0 0.0
        %718 = vmatpush2.msra.mxu0 0.0
        %719 = vmatprep.subr.mxu0 0.0
        %720 = vmatpush2.msra.mxu0 0.0
        %721 = vmatprep.subr.mxu0 0.0
        %722 = vmatpush2.msra.mxu0 0.0
        %723 = vmatprep.subr.mxu0 0.0
        %724 = vmatpush2.msra.mxu0 0.0
        %725 = vmatprep.subr.mxu0 0.0
        %726 = vmatpush2.msra.mxu0 0.0
        %727 = vmatprep.subr.mxu0 0.0
        %728 = vmatpush2.msra.mxu0 0.0
        %729 = vmatprep.mubr.f32.mxu0 0.0
        %730 = vmatmul.mubr.f32.gmra.mxu0 %v660
        %v731 = vpop.f32.mrf.mxu0
        %v732 = vadd.f32 0.0, %v731
        %v733 = vpop.f32.mrf.mxu0
        %734 = vmatprep.mubr.f32.mxu0 0.0
        %735 = vmatmul.mubr.f32.gmra.mxu0 %v663
        %v736 = vpop.f32.mrf.mxu0
        %v737 = vadd.f32 0.0, %v736
        %v738 = vpop.f32.mrf.mxu0
        %739 = vdwg.mxu0
        %v741 = vsel %vm658, %v633, 0
        %v744 = vsel %vm658, %v634, 0
        %746 = vmatprep.subr.mxu0 0.0
        %747 = vmatpush1.msra.mxu0 0.0
        %748 = vmatprep.subr.mxu0 0.0
        %749 = vmatpush1.msra.mxu0 0.0
        %750 = vmatprep.subr.mxu0 0.0
        %751 = vmatpush1.msra.mxu0 0.0
        %752 = vmatprep.subr.mxu0 0.0
        %753 = vmatpush1.msra.mxu0 0.0
        %754 = vmatprep.subr.mxu0 0.0
        %755 = vmatpush1.msra.mxu0 0.0
        %756 = vmatprep.subr.mxu0 0.0
        %757 = vmatpush1.msra.mxu0 0.0
        %758 = vmatprep.subr.mxu0 0.0
        %759 = vmatpush1.msra.mxu0 0.0
        %760 = vmatprep.subr.mxu0 0.0
        %761 = vmatpush1.msra.mxu0 0.0
        %762 = vmatprep.subr.mxu0 0.0
        %763 = vmatpush1.msra.mxu0 0.0
        %764 = vmatprep.subr.mxu0 0.0
        %765 = vmatpush1.msra.mxu0 0.0
        %766 = vmatprep.subr.mxu0 0.0
        %767 = vmatpush1.msra.mxu0 0.0
        %768 = vmatprep.subr.mxu0 0.0
        %769 = vmatpush1.msra.mxu0 0.0
        %770 = vmatprep.subr.mxu0 0.0
        %771 = vmatpush1.msra.mxu0 0.0
        %772 = vmatprep.subr.mxu0 0.0
        %773 = vmatpush1.msra.mxu0 0.0
        %774 = vmatprep.subr.mxu0 0.0
        %775 = vmatpush1.msra.mxu0 %v636
        %776 = vmatprep.subr.mxu0 0.0
        %777 = vmatpush1.msra.mxu0 %v635
        %778 = vmatprep.subr.mxu0 0.0
        %779 = vmatpush2.msra.mxu0 0.0
        %780 = vmatprep.subr.mxu0 0.0
        %781 = vmatpush2.msra.mxu0 0.0
        %782 = vmatprep.subr.mxu0 0.0
        %783 = vmatpush2.msra.mxu0 0.0
        %784 = vmatprep.subr.mxu0 0.0
        %785 = vmatpush2.msra.mxu0 0.0
        %786 = vmatprep.subr.mxu0 0.0
        %787 = vmatpush2.msra.mxu0 0.0
        %788 = vmatprep.subr.mxu0 0.0
        %789 = vmatpush2.msra.mxu0 0.0
        %790 = vmatprep.subr.mxu0 0.0
        %791 = vmatpush2.msra.mxu0 0.0
        %792 = vmatprep.subr.mxu0 0.0
        %793 = vmatpush2.msra.mxu0 0.0
        %794 = vmatprep.subr.mxu0 0.0
        %795 = vmatpush2.msra.mxu0 0.0
        %796 = vmatprep.subr.mxu0 0.0
        %797 = vmatpush2.msra.mxu0 0.0
        %798 = vmatprep.subr.mxu0 0.0
        %799 = vmatpush2.msra.mxu0 0.0
        %800 = vmatprep.subr.mxu0 0.0
        %801 = vmatpush2.msra.mxu0 0.0
        %802 = vmatprep.subr.mxu0 0.0
        %803 = vmatpush2.msra.mxu0 0.0
        %804 = vmatprep.subr.mxu0 0.0
        %805 = vmatpush2.msra.mxu0 0.0
        %806 = vmatprep.subr.mxu0 0.0
        %807 = vmatpush2.msra.mxu0 0.0
        %808 = vmatprep.subr.mxu0 0.0
        %809 = vmatpush2.msra.mxu0 0.0
        %810 = vmatprep.mubr.f32.mxu0 0.0
        %811 = vmatmul.mubr.f32.gmra.mxu0 %v741
        %v812 = vpop.f32.mrf.mxu0
        %v813 = vadd.f32 %v732, %v812
        %v814 = vpop.f32.mrf.mxu0
        %815 = vmatprep.mubr.f32.mxu0 0.0
        %816 = vmatmul.mubr.f32.gmra.mxu0 %v744
        %v817 = vpop.f32.mrf.mxu0
        %v818 = vadd.f32 %v737, %v817
        %v819 = vpop.f32.mrf.mxu0
        %820 = vdwg.mxu0
        %s821 = scalar_lea.vmem %s3, 32
        %v822 = vld [vmem:[%s821] sm:$0xff]
        %v823 = vld [vmem:[%s821 + $0x8] sm:$0xff]
        %824 = vrot.lane.b32.xlu0 %v635, 126
        %v825 = vpop.permute.xlu0 %824
        %826 = vrot.lane.b32.xlu0 %v640, 126
        %v827 = vpop.permute.xlu0 %826
        %828 = vrot.lane.b32.xlu0 %v636, 126
        %v829 = vpop.permute.xlu0 %828
        %830 = vrot.lane.b32.xlu0 %v641, 126
        %v831 = vpop.permute.xlu0 %830
        %v832 = vsel %vm483, %v825, %v827
        %v833 = vsel %vm483, %v829, %v831
        %v837 = vsel %vm658, %v822, 0
        %v840 = vsel %vm658, %v823, 0
        %842 = vmatprep.subr.mxu0 0.0
        %843 = vmatpush1.msra.mxu0 0.0
        %844 = vmatprep.subr.mxu0 0.0
        %845 = vmatpush1.msra.mxu0 0.0
        %846 = vmatprep.subr.mxu0 0.0
        %847 = vmatpush1.msra.mxu0 0.0
        %848 = vmatprep.subr.mxu0 0.0
        %849 = vmatpush1.msra.mxu0 0.0
        %850 = vmatprep.subr.mxu0 0.0
        %851 = vmatpush1.msra.mxu0 0.0
        %852 = vmatprep.subr.mxu0 0.0
        %853 = vmatpush1.msra.mxu0 0.0
        %854 = vmatprep.subr.mxu0 0.0
        %855 = vmatpush1.msra.mxu0 0.0
        %856 = vmatprep.subr.mxu0 0.0
        %857 = vmatpush1.msra.mxu0 0.0
        %858 = vmatprep.subr.mxu0 0.0
        %859 = vmatpush1.msra.mxu0 0.0
        %860 = vmatprep.subr.mxu0 0.0
        %861 = vmatpush1.msra.mxu0 0.0
        %862 = vmatprep.subr.mxu0 0.0
        %863 = vmatpush1.msra.mxu0 0.0
        %864 = vmatprep.subr.mxu0 0.0
        %865 = vmatpush1.msra.mxu0 0.0
        %866 = vmatprep.subr.mxu0 0.0
        %867 = vmatpush1.msra.mxu0 0.0
        %868 = vmatprep.subr.mxu0 0.0
        %869 = vmatpush1.msra.mxu0 0.0
        %870 = vmatprep.subr.mxu0 0.0
        %871 = vmatpush1.msra.mxu0 %v833
        %872 = vmatprep.subr.mxu0 0.0
        %873 = vmatpush1.msra.mxu0 %v832
        %874 = vmatprep.subr.mxu0 0.0
        %875 = vmatpush2.msra.mxu0 0.0
        %876 = vmatprep.subr.mxu0 0.0
        %877 = vmatpush2.msra.mxu0 0.0
        %878 = vmatprep.subr.mxu0 0.0
        %879 = vmatpush2.msra.mxu0 0.0
        %880 = vmatprep.subr.mxu0 0.0
        %881 = vmatpush2.msra.mxu0 0.0
        %882 = vmatprep.subr.mxu0 0.0
        %883 = vmatpush2.msra.mxu0 0.0
        %884 = vmatprep.subr.mxu0 0.0
        %885 = vmatpush2.msra.mxu0 0.0
        %886 = vmatprep.subr.mxu0 0.0
        %887 = vmatpush2.msra.mxu0 0.0
        %888 = vmatprep.subr.mxu0 0.0
        %889 = vmatpush2.msra.mxu0 0.0
        %890 = vmatprep.subr.mxu0 0.0
        %891 = vmatpush2.msra.mxu0 0.0
        %892 = vmatprep.subr.mxu0 0.0
        %893 = vmatpush2.msra.mxu0 0.0
        %894 = vmatprep.subr.mxu0 0.0
        %895 = vmatpush2.msra.mxu0 0.0
        %896 = vmatprep.subr.mxu0 0.0
        %897 = vmatpush2.msra.mxu0 0.0
        %898 = vmatprep.subr.mxu0 0.0
        %899 = vmatpush2.msra.mxu0 0.0
        %900 = vmatprep.subr.mxu0 0.0
        %901 = vmatpush2.msra.mxu0 0.0
        %902 = vmatprep.subr.mxu0 0.0
        %903 = vmatpush2.msra.mxu0 0.0
        %904 = vmatprep.subr.mxu0 0.0
        %905 = vmatpush2.msra.mxu0 0.0
        %906 = vmatprep.mubr.f32.mxu0 0.0
        %907 = vmatmul.mubr.f32.gmra.mxu0 %v837
        %v908 = vpop.f32.mrf.mxu0
        %v909 = vadd.f32 0.0, %v908
        %v910 = vpop.f32.mrf.mxu0
        %911 = vmatprep.mubr.f32.mxu0 0.0
        %912 = vmatmul.mubr.f32.gmra.mxu0 %v840
        %v913 = vpop.f32.mrf.mxu0
        %v914 = vadd.f32 0.0, %v913
        %v915 = vpop.f32.mrf.mxu0
        %916 = vdwg.mxu0
        %v917 = vadd.f32 %v813, %v909
        %v918 = vadd.f32 %v818, %v914
        %v919 = vld [vmem:[%s4] sm:$0xff]
        %v920 = vld [vmem:[%s4 + $0x8] sm:$0xff]
        %922 = vset.pattern.permute.xlu0 2
        %923 = vperm.xlu0 %922, %v919
        %v924 = vpop.permute.xlu0 %923
        %927 = vset.pattern.permute.xlu0 2
        %928 = vperm.xlu0 %927, %v920
        %v929 = vpop.permute.xlu0 %928
        %v931 = vmul.f32 %v917, %v924
        %v932 = vmul.f32 %v918, %v929
        %933 = vset.pattern.permute.xlu0 3
        %934 = vperm.xlu0 %933, %v919
        %v935 = vpop.permute.xlu0 %934
        %937 = vset.pattern.permute.xlu0 3
        %938 = vperm.xlu0 %937, %v920
        %v939 = vpop.permute.xlu0 %938
        %v941 = vadd.f32 %v931, %v935
        %v942 = vadd.f32 %v932, %v939
        %v943 = vmax.f32 %v941, 0.0
        %v944 = vmax.f32 %v942, 0.0
        %945 = vst [vmem:[%s262] sm:$0xff] %v943
        %946 = vst [vmem:[%s262 + $0x8] sm:$0xff] %v944
        %s947 = sand.u32 %s160, 1
        %s948 = scalar_lea.sflag [#allocation5], %s947
        %s949 = sand.u32 %s160, 1
        %s950 = smul.addr %s949, 16
        %s951 = scalar_lea.vmem [#allocation4], %s950
        // Predicated region
        $region41: #{double_conv.1} parent=39 // pred_check
          %p952 = pneg %p170
        $region42: #{double_conv.1} parent=39 // pred_check_branch
          %954 = sbr.rel (%p952) target = $region44
        $region43: #{double_conv.1} parent=39 // pred_region
          %s956 = ssub.s32 256, 256
          %957 = vsyncadd %s948, %s956
          %s958 = smul.addr %s23, 4
          %s959 = sadd.s32 %s24, %s958
          %s960 = smul.addr %s959, 128
          %s961 = scalar_lea.hbm %s5, %s960
          %s962 = sshll.u32 %s951, 4
          %s963 = int_to_ptr.vmem [resolvable:$true] %s962
          %968 = dma.vmem_to_hbm [thread:$0]  %s963, 256, %s961, %s948, 128, 256, 8
        $region44: #{double_conv.1} parent=39 // pred_fallthru
          _
      $region40: #{double_conv.1} parent=5 // pred_fallthru
        _
      %p969 = scmp.le.s32.totalorder 2, %s14
      // Predicated region
      $region45: #{double_conv.1} parent=5 // pred_check
        %p970 = pneg %p969
      $region46: #{double_conv.1} parent=5 // pred_check_branch
        %972 = sbr.rel (%p970) target = $region48
      $region47: #{double_conv.1} parent=5 // pred_region
        %s973 = ssub.s32 %s14, 2
        // Predicated region
        $region49: #{double_conv.1} parent=47 // pred_check
          %p974 = pneg %p176
        $region50: #{double_conv.1} parent=47 // pred_check_branch
          %976 = sbr.rel (%p974) target = $region52
        $region51: #{double_conv.1} parent=47 // pred_region
          %s977 = sand.u32 %s161, 1
          %s978 = scalar_lea.sflag [#allocation5], %s977
          %s979 = sand.u32 %s161, 1
          %s980 = smul.addr %s979, 16
          %s981 = scalar_lea.vmem [#allocation4], %s980
          %982 = dma.done %s978, 256
        $region52: #{double_conv.1} parent=47 // pred_fallthru
          _
      $region48: #{double_conv.1} parent=5 // pred_fallthru
        _
    $region6: #{double_conv.1} parent=1 // loop_footer
      %s18 = sadd.s32 1, %s14
    $region7: #{double_conv.1} parent=1 // loop_footer_branch
      %13 = sbr.rel target = $region3
    $region8: #{double_conv.1} parent=1 // loop_exit
      _
    %983 = vsyncpa [#allocation5], 1
    %s984 = scalar_lea.sflag [#allocation5], 1
    %985 = vsyncpa %s984, 1

</llo_original>
